<compile_context>
chip_gen: v7x
topology: tpu7x:2x2x1
jax: 0.10.0
libtpu: 0.0.40
codegen_flags: <defaults>
</compile_context>

<pallas_src>
import functools

import jax
import jax.numpy as jnp
from jax.experimental import pallas as pl
from jax.experimental.pallas import tpu as pltpu


def _round_up(x, m):
    return (x + m - 1) // m * m


def trinity_kernel(h_ref, head_w_ref, w1_ref, b1_ref, w2_ref, b2_ref, out_ref):
    # In-kernel fp32 -> bf16 cast: h is read from HBM exactly once (fp32), and
    # the MXU runs at native bf16 rate with fp32 accumulation.
    h = h_ref[...].astype(jnp.bfloat16)                     # (tm, n_embd)

    # head: logits = h @ head_W^T  (weights pre-transposed to (in, out), no bias)
    logits = jnp.dot(h, head_w_ref[...],
                     preferred_element_type=jnp.float32)    # (tm, vocab)

    # probe: Linear -> ReLU -> Linear
    x = jnp.dot(h, w1_ref[...],
                preferred_element_type=jnp.float32) + b1_ref[...]
    x = jnp.maximum(x, 0.0).astype(w2_ref.dtype)
    probe = jnp.dot(x, w2_ref[...],
                    preferred_element_type=jnp.float32) + b2_ref[...]  # (tm, 192)

    # [logits | probe] assembled on-chip, single full-tile store; DMA-bound
    # regime leaves plenty of slack for the one unaligned concat boundary.
    out_ref[...] = jnp.concatenate([logits, probe], axis=-1).astype(out_ref.dtype)


def prepare_params(head_w, w1, b1, w2, b2):
    """One-time parameter prep (hoisted out of the forward pass).

    Takes PyTorch-layout (out_features, in_features) weights, returns
    (in, out)-transposed bf16 weights and fp32 row-vector biases.
    """
    head_w_t = jnp.asarray(head_w).T.astype(jnp.bfloat16)   # (n_embd, vocab)
    w1_t = jnp.asarray(w1).T.astype(jnp.bfloat16)            # (n_embd, mid)
    b1_2d = jnp.asarray(b1).reshape(1, -1).astype(jnp.float32)
    w2_t = jnp.asarray(w2).T.astype(jnp.bfloat16)            # (mid, 192)
    b2_2d = jnp.asarray(b2).reshape(1, -1).astype(jnp.float32)
    return head_w_t, w1_t, b1_2d, w2_t, b2_2d


@functools.partial(jax.jit, static_argnames=("tm", "out_dtype"))
def trinity_forward(h, head_w_t, w1_t, b1_2d, w2_t, b2_2d, *,
                    tm=2048, out_dtype=jnp.float32):
    """h: (B, T, n_embd) fp32.  Params as produced by prepare_params()."""
    B, T, n_embd = h.shape
    vocab = head_w_t.shape[1]
    mid = w1_t.shape[1]
    probe_out = w2_t.shape[1]
    out_dim = vocab + probe_out                  # 61 + 192 = 253 at module defaults

    M = B * T
    h2 = h.reshape(M, n_embd)                    # contiguous reshape: free, no copy

    # Sublane-aligned (x16 for bf16 packing) row tile; no padding of h — the
    # grid is a cdiv and Pallas bounds the partial last block.
    tm_eff = min(tm, _round_up(M, 16))
    if tm_eff >= M and M >= 512:
        # Keep >= 2 grid tiles for moderately sized problems so the "parallel"
        # row axis shards across v7x's two TensorCores.
        tm_eff = _round_up(pl.cdiv(M, 2), 16)
    num_tiles = pl.cdiv(M, tm_eff)

    flops = 2 * M * (n_embd * (vocab + mid) + mid * probe_out)
    bytes_accessed = (h2.size * h2.dtype.itemsize
                      + M * out_dim * jnp.dtype(out_dtype).itemsize
                      + (head_w_t.size + w1_t.size + w2_t.size) * 2
                      + (mid + probe_out) * 4)

    out = pl.pallas_call(
        trinity_kernel,
        out_shape=jax.ShapeDtypeStruct((M, out_dim), out_dtype),
        grid_spec=pl.GridSpec(
            grid=(num_tiles,),
            in_specs=[
                pl.BlockSpec((tm_eff, n_embd), lambda i: (i, 0)),
                # Grid-invariant weights/biases: full-array blocks, constant maps.
                # (pipeline_mode=pl.Buffered(1) would shave ~0.4 MiB VMEM; left
                #  at default buffering for lowering robustness.)
                pl.BlockSpec((n_embd, vocab), lambda i: (0, 0)),
                pl.BlockSpec((n_embd, mid), lambda i: (0, 0)),
                pl.BlockSpec((1, mid), lambda i: (0, 0)),
                pl.BlockSpec((mid, probe_out), lambda i: (0, 0)),
                pl.BlockSpec((1, probe_out), lambda i: (0, 0)),
            ],
            out_specs=pl.BlockSpec((tm_eff, out_dim), lambda i: (i, 0)),
        ),
        compiler_params=pltpu.CompilerParams(
            dimension_semantics=("parallel",)),
        cost_estimate=pl.CostEstimate(
            flops=flops, transcendentals=0, bytes_accessed=bytes_accessed),
    )(h2, head_w_t, w1_t, b1_2d, w2_t, b2_2d)

    # Exact [logits(vocab) | probe(192)] layout already — only a free reshape.
    return out.reshape(B, T, out_dim)


def trinity_reference(h, head_w, w1, b1, w2, b2):
    """Pure-JAX fp32 reference with PyTorch-layout (out, in) weights."""
    logits = h @ head_w.T
    x = jnp.maximum(h @ w1.T + b1, 0.0)
    probe = x @ w2.T + b2
    return jnp.concatenate([logits, probe], axis=-1)


if __name__ == "__main__":
    # Small shapes consistent with the module's forward
    # (n_embd/mid scaled down; vocab=61 and 64*3=192 fixed by the module).
    B, T = 2, 8
    n_embd = 32
    mid_dim = 16
    vocab_size = 61
    probe_out = 64 * 3

    key = jax.random.PRNGKey(0)
    k_h, k_hw, k_w1, k_b1, k_w2, k_b2 = jax.random.split(key, 6)

    h = jax.random.normal(k_h, (B, T, n_embd), dtype=jnp.float32)

    # Parameters in PyTorch nn.Linear layout: weight (out_features, in_features).
    head_w = jax.random.normal(k_hw, (vocab_size, n_embd), dtype=jnp.float32) * 0.05
    w1 = jax.random.normal(k_w1, (mid_dim, n_embd), dtype=jnp.float32) * 0.05
    b1 = jax.random.normal(k_b1, (mid_dim,), dtype=jnp.float32) * 0.05
    w2 = jax.random.normal(k_w2, (probe_out, mid_dim), dtype=jnp.float32) * 0.05
    b2 = jax.random.normal(k_b2, (probe_out,), dtype=jnp.float32) * 0.05

    params = prepare_params(head_w, w1, b1, w2, b2)   # one-time prep

    out = trinity_forward(h, *params)
    out = jax.block_until_ready(out)

    ref = trinity_reference(h, head_w, w1, b1, w2, b2)
    assert out.shape == (B, T, vocab_size + probe_out)
    # bf16 MXU operands with fp32 accumulation: relaxed tolerance vs fp32 ref.
    assert jnp.allclose(out, ref, atol=3e-2, rtol=3e-2), "mismatch vs reference"

    print("KERNEL_OK")
</pallas_src>

<mosaic_0001>
module attributes {stable_mosaic.version = 11 : i64} {
  func.func @trinity_kernel(%arg0: i32, %arg1: memref<16x32xf32, #tpu.memory_space<vmem>>, %arg2: memref<32x61xbf16, #tpu.memory_space<vmem>>, %arg3: memref<32x16xbf16, #tpu.memory_space<vmem>>, %arg4: memref<1x16xf32, #tpu.memory_space<vmem>>, %arg5: memref<16x192xbf16, #tpu.memory_space<vmem>>, %arg6: memref<1x192xf32, #tpu.memory_space<vmem>>, %arg7: memref<16x253xf32, #tpu.memory_space<vmem>>) attributes {dimension_semantics = [#tpu.dimension_semantics<parallel>], iteration_bounds = array<i64: 1>, scalar_prefetch = 0 : i64, scratch_operands = 0 : i64, tpu.core_type = #tpu.core_type<tc>, window_params = [{transform_indices = @transform_0, window_bounds = array<i64: 16, 32>}, {pipeline_mode = #tpu.pipeline_mode<synchronous>, transform_indices = @transform_1, window_bounds = array<i64: 32, 61>}, {pipeline_mode = #tpu.pipeline_mode<synchronous>, transform_indices = @transform_2, window_bounds = array<i64: 32, 16>}, {pipeline_mode = #tpu.pipeline_mode<synchronous>, transform_indices = @transform_3, window_bounds = array<i64: 1, 16>}, {pipeline_mode = #tpu.pipeline_mode<synchronous>, transform_indices = @transform_4, window_bounds = array<i64: 16, 192>}, {pipeline_mode = #tpu.pipeline_mode<synchronous>, transform_indices = @transform_5, window_bounds = array<i64: 1, 192>}, {transform_indices = @transform_6, window_bounds = array<i64: 16, 253>}]} {
    %c0 = arith.constant 0 : index
    %c0_0 = arith.constant 0 : index
    %0 = vector.load %arg1[%c0, %c0_0] : memref<16x32xf32, #tpu.memory_space<vmem>>, vector<16x32xf32>
    %1 = arith.truncf %0 : vector<16x32xf32> to vector<16x32xbf16>
    %c0_1 = arith.constant 0 : index
    %c0_2 = arith.constant 0 : index
    %2 = vector.load %arg2[%c0_1, %c0_2] : memref<32x61xbf16, #tpu.memory_space<vmem>>, vector<32x61xbf16>
    %cst = arith.constant dense<0.000000e+00> : vector<16x61xf32>
    %3 = tpu.matmul %1, %2, %cst {dimension_numbers = #tpu.dot_dimension_numbers<[1], [0], [0], [1], [0, 0, 1, 1], [], []>} : vector<16x32xbf16>, vector<32x61xbf16>, vector<16x61xf32> -> vector<16x61xf32>
    %c0_3 = arith.constant 0 : index
    %c0_4 = arith.constant 0 : index
    %4 = vector.load %arg3[%c0_3, %c0_4] : memref<32x16xbf16, #tpu.memory_space<vmem>>, vector<32x16xbf16>
    %cst_5 = arith.constant dense<0.000000e+00> : vector<16x16xf32>
    %5 = tpu.matmul %1, %4, %cst_5 {dimension_numbers = #tpu.dot_dimension_numbers<[1], [0], [0], [1], [0, 0, 1, 1], [], []>} : vector<16x32xbf16>, vector<32x16xbf16>, vector<16x16xf32> -> vector<16x16xf32>
    %c0_6 = arith.constant 0 : index
    %c0_7 = arith.constant 0 : index
    %6 = vector.load %arg4[%c0_6, %c0_7] : memref<1x16xf32, #tpu.memory_space<vmem>>, vector<1x16xf32>
    %7 = vector.broadcast %6 : vector<1x16xf32> to vector<16x16xf32>
    %8 = arith.addf %5, %7 : vector<16x16xf32>
    %cst_8 = arith.constant 0.000000e+00 : f32
    %9 = vector.broadcast %cst_8 : f32 to vector<16x16xf32>
    %10 = arith.maximumf %8, %9 : vector<16x16xf32>
    %11 = arith.truncf %10 : vector<16x16xf32> to vector<16x16xbf16>
    %c0_9 = arith.constant 0 : index
    %c0_10 = arith.constant 0 : index
    %12 = vector.load %arg5[%c0_9, %c0_10] : memref<16x192xbf16, #tpu.memory_space<vmem>>, vector<16x192xbf16>
    %cst_11 = arith.constant dense<0.000000e+00> : vector<16x192xf32>
    %13 = tpu.matmul %11, %12, %cst_11 {dimension_numbers = #tpu.dot_dimension_numbers<[1], [0], [0], [1], [0, 0, 1, 1], [], []>} : vector<16x16xbf16>, vector<16x192xbf16>, vector<16x192xf32> -> vector<16x192xf32>
    %c0_12 = arith.constant 0 : index
    %c0_13 = arith.constant 0 : index
    %14 = vector.load %arg6[%c0_12, %c0_13] : memref<1x192xf32, #tpu.memory_space<vmem>>, vector<1x192xf32>
    %15 = vector.broadcast %14 : vector<1x192xf32> to vector<16x192xf32>
    %16 = arith.addf %13, %15 : vector<16x192xf32>
    %17 = tpu.concatenate %3, %16 in 1 : vector<16x61xf32>, vector<16x192xf32> -> vector<16x253xf32>
    %c0_14 = arith.constant 0 : index
    %c0_15 = arith.constant 0 : index
    %18 = vector.load %arg7[%c0_14, %c0_15] : memref<16x253xf32, #tpu.memory_space<vmem>>, vector<16x253xf32>
    tpu.vector_store %arg7[%c0_14, %c0_15], %17 {strides = array<i32>} : memref<16x253xf32, #tpu.memory_space<vmem>>, vector<16x253xf32>,
    return
  }
  func.func @transform_0(%arg0: i32) -> (i32, i32) {
    %c0_i32 = arith.constant 0 : i32
    %c0_i32_0 = arith.constant 0 : i32
    return %arg0, %c0_i32 : i32, i32
  }
  func.func @transform_1(%arg0: i32) -> (i32, i32) {
    %c0_i32 = arith.constant 0 : i32
    %c0_i32_0 = arith.constant 0 : i32
    %c0_i32_1 = arith.constant 0 : i32
    return %c0_i32, %c0_i32_0 : i32, i32
  }
  func.func @transform_2(%arg0: i32) -> (i32, i32) {
    %c0_i32 = arith.constant 0 : i32
    %c0_i32_0 = arith.constant 0 : i32
    %c0_i32_1 = arith.constant 0 : i32
    return %c0_i32, %c0_i32_0 : i32, i32
  }
  func.func @transform_3(%arg0: i32) -> (i32, i32) {
    %c0_i32 = arith.constant 0 : i32
    %c0_i32_0 = arith.constant 0 : i32
    %c0_i32_1 = arith.constant 0 : i32
    return %c0_i32, %c0_i32_0 : i32, i32
  }
  func.func @transform_4(%arg0: i32) -> (i32, i32) {
    %c0_i32 = arith.constant 0 : i32
    %c0_i32_0 = arith.constant 0 : i32
    %c0_i32_1 = arith.constant 0 : i32
    return %c0_i32, %c0_i32_0 : i32, i32
  }
  func.func @transform_5(%arg0: i32) -> (i32, i32) {
    %c0_i32 = arith.constant 0 : i32
    %c0_i32_0 = arith.constant 0 : i32
    %c0_i32_1 = arith.constant 0 : i32
    return %c0_i32, %c0_i32_0 : i32, i32
  }
  func.func @transform_6(%arg0: i32) -> (i32, i32) {
    %c0_i32 = arith.constant 0 : i32
    %c0_i32_0 = arith.constant 0 : i32
    return %arg0, %c0_i32 : i32, i32
  }
}

</mosaic_0001>

<llo_original>
// kernel: trinity_forward.1
$region0: #{trinity_forward.1}
  #allocation0 [shape = 'u32[]', space=smem, size = 0x4, offset = 0x4, fixed_abs, tag = 'smem constant byte address 0x4 - core index']
  #allocation1 [shape = 'u32[144,128]{1,0:T(1,128)}', space=vmem, size = 0x12000, scoped, tag = 'internal scratch']
  %s0 = inlined_call_operand.vmem [shape: f32[16,32], index: 0, kind: input, shape index: {}]
  %s1 = inlined_call_operand.hbm [shape: bf16[32,61], index: 1, kind: input, shape index: {}]
  %s2 = inlined_call_operand.vmem [shape: bf16[32,16], index: 2, kind: input, shape index: {}]
  %s3 = inlined_call_operand.vmem [shape: f32[1,16], index: 3, kind: input, shape index: {}]
  %s4 = inlined_call_operand.vmem [shape: bf16[16,192], index: 4, kind: input, shape index: {}]
  %s5 = inlined_call_operand.vmem [shape: f32[1,192], index: 5, kind: input, shape index: {}]
  %s6 = inlined_call_operand.hbm [shape: f32[16,253], index: 6, kind: output, shape index: {}]
  %s7 = sld [smem:[#allocation0]]
  $region38: #{trinity_forward.1} parent=0
    _
  %s9 = ssub.s32 1, %s7
  %s10 = scalar_select 0, %s9, %s7
  $region1: #{trinity_forward.1} parent=0
    #allocation2 [shape = 'u8[8192]{0}', space=vmem, size = 0x2000, scoped, tag = 'input window, operand 1, single buffered']
    #allocation3 [shape = 's32[1]{0}', space=sflag, size = 0x4, scoped, tag = 'scoped memory for trinity_forward.1']
    #allocation4 [shape = 's32[1]{0}', space=sflag, size = 0x4, scoped, tag = 'scoped memory for trinity_forward.1']
    #allocation5 [shape = 'u8[16384]{0}', space=vmem, size = 0x4000, scoped, tag = 'output window, operand 0, single buffered']
    %11 = vsyncpa [#allocation3], 0
    %12 = vsyncpa [#allocation4], 0
    // Predicated region
    $region2: #{trinity_forward.1} parent=1 // pred_check
      _
    $region3: #{trinity_forward.1} parent=1 // pred_check_branch
      %14 = sbr.rel (0) target = $region5
    $region4: #{trinity_forward.1} parent=1 // pred_region
      _
    $region5: #{trinity_forward.1} parent=1 // pred_fallthru
      _
    // Predicated region
    $region6: #{trinity_forward.1} parent=1 // pred_check
      _
    $region7: #{trinity_forward.1} parent=1 // pred_check_branch
      %16 = sbr.rel (0) target = $region9
    $region8: #{trinity_forward.1} parent=1 // pred_region
      %s18 = ssub.s32 256, 256
      %19 = vsyncadd [#allocation3], %s18
      %s20 = sshll.u32 [#allocation2], 4
      %s21 = int_to_ptr.vmem [resolvable:$true] %s20
      %26 = dma.hbm_to_vmem [thread:$0]  %s1, 256, %s21, [#allocation3], 64, 64, 4
    $region9: #{trinity_forward.1} parent=1 // pred_fallthru
      _
    // Predicated region
    $region10: #{trinity_forward.1} parent=1 // pred_check
      _
    $region11: #{trinity_forward.1} parent=1 // pred_check_branch
      %28 = sbr.rel (0) target = $region13
    $region12: #{trinity_forward.1} parent=1 // pred_region
      _
    $region13: #{trinity_forward.1} parent=1 // pred_fallthru
      _
    // Predicated region
    $region14: #{trinity_forward.1} parent=1 // pred_check
      _
    $region15: #{trinity_forward.1} parent=1 // pred_check_branch
      %30 = sbr.rel (0) target = $region17
    $region16: #{trinity_forward.1} parent=1 // pred_region
      _
    $region17: #{trinity_forward.1} parent=1 // pred_fallthru
      _
    // Predicated region
    $region18: #{trinity_forward.1} parent=1 // pred_check
      _
    $region19: #{trinity_forward.1} parent=1 // pred_check_branch
      %32 = sbr.rel (0) target = $region21
    $region20: #{trinity_forward.1} parent=1 // pred_region
      _
    $region21: #{trinity_forward.1} parent=1 // pred_fallthru
      _
    // Predicated region
    $region22: #{trinity_forward.1} parent=1 // pred_check
      _
    $region23: #{trinity_forward.1} parent=1 // pred_check_branch
      %34 = sbr.rel (0) target = $region25
    $region24: #{trinity_forward.1} parent=1 // pred_region
      _
    $region25: #{trinity_forward.1} parent=1 // pred_fallthru
      _
    // Predicated region
    $region26: #{trinity_forward.1} parent=1 // pred_check
      _
    $region27: #{trinity_forward.1} parent=1 // pred_check_branch
      %36 = sbr.rel (0) target = $region29
    $region28: #{trinity_forward.1} parent=1 // pred_region
      %37 = dma.done [#allocation3], 256
    $region29: #{trinity_forward.1} parent=1 // pred_fallthru
      _
    %v39 = vld [vmem:[%s0] sm:$0xff]
    %v40 = vld [vmem:[%s0 + $0x8] sm:$0xff]
    %v41 = vpack.c.bf16 %v40, %v39
    %v42 = vld [vmem:[#allocation2] sm:$0xf]
    %v43 = vld [vmem:[#allocation2 + $0x4] sm:$0xf]
    %v44 = vld [vmem:[#allocation2 + $0x8] sm:$0xf]
    %v45 = vld [vmem:[#allocation2 + $0xc] sm:$0xf]
    %v50 = vunpack.c.l.b16 %v42
    %v51 = vunpack.c.l.b16 %v43
    %v52 = vunpack.c.l.b16 %v44
    %v53 = vunpack.c.l.b16 %v45
    %v54 = vpack.c.b16 %v51, %v50
    %v55 = vpack.c.b16 %v53, %v52
    %vm58 = vcmask 261120
    %v60 = vsel %vm58, %v41, 0
    %62 = vmatprep.subr.bf16.mxu0 0
    %63 = vmatpush1.bf16.msra.mxu0 %v54
    %64 = vmatprep.subr.bf16.mxu0 0
    %65 = vmatpush1.bf16.msra.mxu0 %v55
    %66 = vmatprep.subr.bf16.mxu0 0
    %67 = vmatpush1.bf16.msra.mxu0 0
    %68 = vmatprep.subr.bf16.mxu0 0
    %69 = vmatpush1.bf16.msra.mxu0 0
    %70 = vmatprep.subr.bf16.mxu0 0
    %71 = vmatpush1.bf16.msra.mxu0 0
    %72 = vmatprep.subr.bf16.mxu0 0
    %73 = vmatpush1.bf16.msra.mxu0 0
    %74 = vmatprep.subr.bf16.mxu0 0
    %75 = vmatpush1.bf16.msra.mxu0 0
    %76 = vmatprep.subr.bf16.mxu0 0
    %77 = vmatpush1.bf16.msra.mxu0 0
    %78 = vmatprep.subr.bf16.mxu0 0
    %79 = vmatpush1.bf16.msra.mxu0 0
    %80 = vmatprep.subr.bf16.mxu0 0
    %81 = vmatpush1.bf16.msra.mxu0 0
    %82 = vmatprep.subr.bf16.mxu0 0
    %83 = vmatpush1.bf16.msra.mxu0 0
    %84 = vmatprep.subr.bf16.mxu0 0
    %85 = vmatpush1.bf16.msra.mxu0 0
    %86 = vmatprep.subr.bf16.mxu0 0
    %87 = vmatpush1.bf16.msra.mxu0 0
    %88 = vmatprep.subr.bf16.mxu0 0
    %89 = vmatpush1.bf16.msra.mxu0 0
    %90 = vmatprep.subr.bf16.mxu0 0
    %91 = vmatpush1.bf16.msra.mxu0 0
    %92 = vmatprep.subr.bf16.mxu0 0
    %93 = vmatpush1.bf16.msra.mxu0 0
    %94 = vmatprep.mubr.bf16.mxu0 0
    %95 = vmatmul.mubr.bf16.gmra.mrb[0].mxu0 %v60
    %v96 = vpop.f32.mrb[0].mxu0
    %v97 = vadd.f32 0.0, %v96
    %v98 = vpop.f32.mrb[0].mxu0
    %v99 = vpop.f32.mrb[0].mxu0
    %v100 = vadd.f32 0.0, %v99
    %v101 = vpop.f32.mrb[0].mxu0
    %102 = vdwg.mxu0
    %v103 = vld [vmem:[%s2] sm:$0xf]
    %v104 = vld [vmem:[%s2 + $0x4] sm:$0xf]
    %v105 = vld [vmem:[%s2 + $0x8] sm:$0xf]
    %v106 = vld [vmem:[%s2 + $0xc] sm:$0xf]
    %v107 = vld [vmem:[%s3] sm:$0x1]
    %v109 = vlaneseq
    %v110 = vshrl.u32 %v109, 7
    %v111 = vsub.s32 0, %v110
    %v112 = vrot.slane %v107, %v111
    %v118 = vunpack.c.l.b16 %v103
    %v119 = vunpack.c.l.b16 %v104
    %v120 = vunpack.c.l.b16 %v105
    %v121 = vunpack.c.l.b16 %v106
    %v122 = vpack.c.b16 %v119, %v118
    %v123 = vpack.c.b16 %v121, %v120
    %126 = vmatprep.subr.bf16.mxu0 0
    %127 = vmatpush1.bf16.msra.mxu0 %v122
    %128 = vmatprep.subr.bf16.mxu0 0
    %129 = vmatpush1.bf16.msra.mxu0 %v123
    %130 = vmatprep.subr.bf16.mxu0 0
    %131 = vmatpush1.bf16.msra.mxu0 0
    %132 = vmatprep.subr.bf16.mxu0 0
    %133 = vmatpush1.bf16.msra.mxu0 0
    %134 = vmatprep.subr.bf16.mxu0 0
    %135 = vmatpush1.bf16.msra.mxu0 0
    %136 = vmatprep.subr.bf16.mxu0 0
    %137 = vmatpush1.bf16.msra.mxu0 0
    %138 = vmatprep.subr.bf16.mxu0 0
    %139 = vmatpush1.bf16.msra.mxu0 0
    %140 = vmatprep.subr.bf16.mxu0 0
    %141 = vmatpush1.bf16.msra.mxu0 0
    %142 = vmatprep.subr.bf16.mxu0 0
    %143 = vmatpush1.bf16.msra.mxu0 0
    %144 = vmatprep.subr.bf16.mxu0 0
    %145 = vmatpush1.bf16.msra.mxu0 0
    %146 = vmatprep.subr.bf16.mxu0 0
    %147 = vmatpush1.bf16.msra.mxu0 0
    %148 = vmatprep.subr.bf16.mxu0 0
    %149 = vmatpush1.bf16.msra.mxu0 0
    %150 = vmatprep.subr.bf16.mxu0 0
    %151 = vmatpush1.bf16.msra.mxu0 0
    %152 = vmatprep.subr.bf16.mxu0 0
    %153 = vmatpush1.bf16.msra.mxu0 0
    %154 = vmatprep.subr.bf16.mxu0 0
    %155 = vmatpush1.bf16.msra.mxu0 0
    %156 = vmatprep.subr.bf16.mxu0 0
    %157 = vmatpush1.bf16.msra.mxu0 0
    %158 = vmatprep.mubr.bf16.mxu0 0
    %159 = vmatmul.mubr.bf16.gmra.mrb[0].mxu0 %v60
    %v160 = vpop.f32.mrb[0].mxu0
    %v161 = vadd.f32 %v112, %v160
    %v162 = vpop.f32.mrb[0].mxu0
    %v163 = vpop.f32.mrb[0].mxu0
    %v164 = vadd.f32 %v112, %v163
    %v165 = vpop.f32.mrb[0].mxu0
    %166 = vdwg.mxu0
    %v167 = vmax.f32 %v161, 0.0
    %v168 = vmax.f32 %v164, 0.0
    %v169 = vpack.c.bf16 %v168, %v167
    %v170 = vld [vmem:[%s4] sm:$0xff]
    %v171 = vld [vmem:[%s4 + $0x8] sm:$0xff]
    %v172 = vld [vmem:[%s5] sm:$0x3]
    %v174 = vlaneseq
    %v175 = vshrl.u32 %v174, 7
    %v176 = vsub.s32 0, %v175
    %v177 = vrot.slane %v172, %v176
    %v178 = vlaneseq
    %v179 = vshrl.u32 %v178, 7
    %v180 = vsub.s32 1, %v179
    %v181 = vrot.slane %v172, %v180
    %v186 = vunpack.c.l.b16 %v170
    %v187 = vunpack.c.h.b16 %v170
    %v188 = vunpack.c.l.b16 %v171
    %v189 = vunpack.c.h.b16 %v171
    %v190 = vpack.c.b16 %v188, %v186
    %v191 = vpack.c.b16 %v189, %v187
    %vm194 = vcmask 130048
    %v196 = vsel %vm194, %v169, 0
    %198 = vmatprep.subr.bf16.mxu0 %v191
    %199 = vmatpush1.bf16.msra.mxu0 %v190
    %200 = vmatprep.subr.bf16.mxu0 0
    %201 = vmatpush1.bf16.msra.mxu0 0
    %202 = vmatprep.subr.bf16.mxu0 0
    %203 = vmatpush1.bf16.msra.mxu0 0
    %204 = vmatprep.subr.bf16.mxu0 0
    %205 = vmatpush1.bf16.msra.mxu0 0
    %206 = vmatprep.subr.bf16.mxu0 0
    %207 = vmatpush1.bf16.msra.mxu0 0
    %208 = vmatprep.subr.bf16.mxu0 0
    %209 = vmatpush1.bf16.msra.mxu0 0
    %210 = vmatprep.subr.bf16.mxu0 0
    %211 = vmatpush1.bf16.msra.mxu0 0
    %212 = vmatprep.subr.bf16.mxu0 0
    %213 = vmatpush1.bf16.msra.mxu0 0
    %214 = vmatprep.subr.bf16.mxu0 0
    %215 = vmatpush1.bf16.msra.mxu0 0
    %216 = vmatprep.subr.bf16.mxu0 0
    %217 = vmatpush1.bf16.msra.mxu0 0
    %218 = vmatprep.subr.bf16.mxu0 0
    %219 = vmatpush1.bf16.msra.mxu0 0
    %220 = vmatprep.subr.bf16.mxu0 0
    %221 = vmatpush1.bf16.msra.mxu0 0
    %222 = vmatprep.subr.bf16.mxu0 0
    %223 = vmatpush1.bf16.msra.mxu0 0
    %224 = vmatprep.subr.bf16.mxu0 0
    %225 = vmatpush1.bf16.msra.mxu0 0
    %226 = vmatprep.subr.bf16.mxu0 0
    %227 = vmatpush1.bf16.msra.mxu0 0
    %228 = vmatprep.subr.bf16.mxu0 0
    %229 = vmatpush1.bf16.msra.mxu0 0
    %230 = vmatprep.mubr.bf16.mxu0 0
    %231 = vmatmul.mubr.bf16.gmra.mrb[0].mxu0 %v196
    %v232 = vpop.f32.mrb[0].mxu0
    %v233 = vadd.f32 %v177, %v232
    %v234 = vpop.f32.mrb[0].mxu0
    %v235 = vadd.f32 %v181, %v234
    %v236 = vpop.f32.mrb[0].mxu0
    %v237 = vadd.f32 %v177, %v236
    %v238 = vpop.f32.mrb[0].mxu0
    %v239 = vadd.f32 %v181, %v238
    %240 = vdwg.mxu0
    %245 = vrot.lane.b32.xlu0 %v233, 61
    %v246 = vpop.permute.xlu0 %245
    %247 = vrot.lane.b32.xlu0 %v235, 61
    %v248 = vpop.permute.xlu0 %247
    %249 = vrot.lane.b32.xlu0 %v237, 61
    %v250 = vpop.permute.xlu0 %249
    %251 = vrot.lane.b32.xlu0 %v239, 61
    %v252 = vpop.permute.xlu0 %251
    %vm253 = vcmask 498688
    %v254 = vsel %vm253, %v246, %v248
    %v255 = vsel %vm253, %v250, %v252
    %v260 = vsel %vm253, %v97, %v246
    %v261 = vsel %vm253, %v100, %v250
    %262 = vst [vmem:[#allocation5] sm:$0xff] %v260
    %vm263 = vcmask 1022976
    %264 = vst.msk [vmem:[#allocation5 + $0x8] sm:$0xff] %vm263, %v254
    %265 = vst [vmem:[#allocation5 + $0x10] sm:$0xff] %v261
    %266 = vst.msk [vmem:[#allocation5 + $0x18] sm:$0xff] %vm263, %v255
    // Predicated region
    $region30: #{trinity_forward.1} parent=1 // pred_check
      _
    $region31: #{trinity_forward.1} parent=1 // pred_check_branch
      %268 = sbr.rel (0) target = $region33
    $region32: #{trinity_forward.1} parent=1 // pred_region
      %s270 = ssub.s32 512, 512
      %271 = vsyncadd [#allocation4], %s270
      %s272 = sshll.u32 [#allocation5], 4
      %s273 = int_to_ptr.vmem [resolvable:$true] %s272
      %278 = dma.vmem_to_hbm [thread:$0]  %s273, 512, %s6, [#allocation4], 256, 256, 16
    $region33: #{trinity_forward.1} parent=1 // pred_fallthru
      _
    // Predicated region
    $region34: #{trinity_forward.1} parent=1 // pred_check
      _
    $region35: #{trinity_forward.1} parent=1 // pred_check_branch
      %280 = sbr.rel (0) target = $region37
    $region36: #{trinity_forward.1} parent=1 // pred_region
      %281 = dma.done [#allocation4], 512
    $region37: #{trinity_forward.1} parent=1 // pred_fallthru
      _
    %282 = vsyncpa [#allocation3], 1
    %283 = vsyncpa [#allocation4], 1

</llo_original>
